<compile_context>
chip_gen: v7x
topology: tpu7x:2x2x1
jax: 0.10.0
libtpu: 0.0.40
codegen_flags: <defaults>
</compile_context>

<pallas_src>
import functools

import jax
import jax.numpy as jnp
from jax.experimental import pallas as pl
from jax.experimental.pallas import tpu as pltpu


HIDDEN_1 = 256
HIDDEN_2 = 128
LANE = 128


def _round_up(x, m):
    return (x + m - 1) // m * m


def qnetwork_kernel(x_ref, w1_ref, b1_ref, w2_ref, b2_ref, w3_ref, b3_ref, o_ref):
    # fc1 + relu  (bf16 x bf16 -> f32 accumulate on the MXU)
    h1 = jnp.dot(x_ref[...], w1_ref[...], preferred_element_type=jnp.float32)
    h1 = jnp.maximum(h1 + b1_ref[...], 0.0)
    # fc2 + relu
    h2 = jnp.dot(h1.astype(w2_ref.dtype), w2_ref[...],
                 preferred_element_type=jnp.float32)
    h2 = jnp.maximum(h2 + b2_ref[...], 0.0)
    # fc3 (lane-padded output, no activation)
    out = jnp.dot(h2.astype(w3_ref.dtype), w3_ref[...],
                  preferred_element_type=jnp.float32) + b3_ref[...]
    o_ref[...] = out.astype(o_ref.dtype)


def prepare_params(params, state_size, action_size):
    """Pad + cast PyTorch-layout (in, out) params for the kernel.

    Returns bf16 weights (K and output-N padded to multiples of 128) and f32
    biases (output bias padded to 128 lanes).
    """
    s_pad = _round_up(state_size, LANE)
    a_pad = _round_up(action_size, LANE)
    w1 = jnp.pad(params["w1"], ((0, s_pad - state_size), (0, 0))).astype(jnp.bfloat16)
    w2 = params["w2"].astype(jnp.bfloat16)
    w3 = jnp.pad(params["w3"], ((0, 0), (0, a_pad - action_size))).astype(jnp.bfloat16)
    b1 = params["b1"].astype(jnp.float32)
    b2 = params["b2"].astype(jnp.float32)
    b3 = jnp.pad(params["b3"], ((0, 0), (0, a_pad - action_size))).astype(jnp.float32)
    return {"w1": w1, "b1": b1, "w2": w2, "b2": b2, "w3": w3, "b3": b3,
            "s_pad": s_pad, "a_pad": a_pad}


@functools.partial(jax.jit, static_argnames=("state_size", "action_size"))
def qnetwork_forward(x, prepared, *, state_size, action_size):
    """x: (B, state_size) float32. prepared: output of prepare_params."""
    w1, b1 = prepared["w1"], prepared["b1"]
    w2, b2 = prepared["w2"], prepared["b2"]
    w3, b3 = prepared["w3"], prepared["b3"]
    s_pad = w1.shape[0]
    a_pad = w3.shape[1]

    B = x.shape[0]
    # Batch tile: >= 8 rows (f32 sublane), 512 (256-aligned for v6e/v7x MXU)
    # once the batch is large enough. Pad B so there is never a partial tile.
    tb = min(512, _round_up(B, 8))
    b_pad = _round_up(B, tb)
    grid = (b_pad // tb,)

    # Zero-pad batch rows and state columns; cast MXU input to bf16.
    x_p = jnp.zeros((b_pad, s_pad), jnp.bfloat16)
    x_p = x_p.at[:B, :state_size].set(x.astype(jnp.bfloat16))

    resident = lambda shape: pl.BlockSpec(shape, lambda i: (0, 0))

    out = pl.pallas_call(
        qnetwork_kernel,
        out_shape=jax.ShapeDtypeStruct((b_pad, a_pad), jnp.float32),
        grid_spec=pltpu.PrefetchScalarGridSpec(
            num_scalar_prefetch=0,
            grid=grid,
            in_specs=[
                pl.BlockSpec((tb, s_pad), lambda i: (i, 0)),   # x tile (pipelined)
                resident((s_pad, HIDDEN_1)),                   # w1
                resident((1, HIDDEN_1)),                       # b1
                resident((HIDDEN_1, HIDDEN_2)),                # w2
                resident((1, HIDDEN_2)),                       # b2
                resident((HIDDEN_2, a_pad)),                   # w3
                resident((1, a_pad)),                          # b3
            ],
            out_specs=pl.BlockSpec((tb, a_pad), lambda i: (i, 0)),
        ),
        compiler_params=pltpu.CompilerParams(
            dimension_semantics=("parallel",),
        ),
    )(x_p, w1, b1, w2, b2, w3, b3)

    # Slice away batch padding and the lane padding of the action dim.
    return out[:B, :action_size]


def init_params(key, state_size, action_size,
                hidden_layer_1=HIDDEN_1, hidden_layer_2=HIDDEN_2):
    """Deterministic init mimicking PyTorch Linear default (uniform +/- 1/sqrt(fan_in)).

    Weights are stored (in_features, out_features) so the kernel computes
    x @ W + b (== PyTorch's x @ W_pt.T + b).
    """
    keys = jax.random.split(key, 6)

    def linear(kw, kb, fan_in, fan_out):
        bound = 1.0 / jnp.sqrt(jnp.float32(fan_in))
        w = jax.random.uniform(kw, (fan_in, fan_out), jnp.float32, -bound, bound)
        b = jax.random.uniform(kb, (1, fan_out), jnp.float32, -bound, bound)
        return w, b

    w1, b1 = linear(keys[0], keys[1], state_size, hidden_layer_1)
    w2, b2 = linear(keys[2], keys[3], hidden_layer_1, hidden_layer_2)
    w3, b3 = linear(keys[4], keys[5], hidden_layer_2, action_size)
    return {"w1": w1, "b1": b1, "w2": w2, "b2": b2, "w3": w3, "b3": b3}


def reference_forward(x, p):
    """Pure-JAX reference mirroring the kernel's mixed precision
    (bf16 MXU inputs, f32 accumulation / biases)."""
    bf = jnp.bfloat16
    h1 = jnp.dot(x.astype(bf), p["w1"].astype(bf),
                 preferred_element_type=jnp.float32) + p["b1"]
    h1 = jnp.maximum(h1, 0.0)
    h2 = jnp.dot(h1.astype(bf), p["w2"].astype(bf),
                 preferred_element_type=jnp.float32) + p["b2"]
    h2 = jnp.maximum(h2, 0.0)
    return jnp.dot(h2.astype(bf), p["w3"].astype(bf),
                   preferred_element_type=jnp.float32) + p["b3"]


if __name__ == "__main__":
    key = jax.random.PRNGKey(0)
    k_x, k_p = jax.random.split(key)

    batch = 2
    state_size = 8
    action_size = 4

    x = jax.random.normal(k_x, (batch, state_size), jnp.float32)
    params = init_params(k_p, state_size, action_size)
    prepared = prepare_params(params, state_size, action_size)

    out = qnetwork_forward(x, prepared, state_size=state_size, action_size=action_size)
    out = jax.block_until_ready(out)

    ref = reference_forward(x, params)
    assert out.shape == (batch, action_size), out.shape
    assert jnp.allclose(out, ref, atol=1e-2, rtol=1e-2), "mismatch vs reference"

    print("KERNEL_OK")
</pallas_src>

<mosaic_0001>
module attributes {stable_mosaic.version = 11 : i64} {
  func.func @qnetwork_kernel(%arg0: i32, %arg1: memref<8x128xbf16, #tpu.memory_space<vmem>>, %arg2: memref<128x256xbf16, #tpu.memory_space<vmem>>, %arg3: memref<1x256xf32, #tpu.memory_space<vmem>>, %arg4: memref<256x128xbf16, #tpu.memory_space<vmem>>, %arg5: memref<1x128xf32, #tpu.memory_space<vmem>>, %arg6: memref<128x128xbf16, #tpu.memory_space<vmem>>, %arg7: memref<1x128xf32, #tpu.memory_space<vmem>>, %arg8: memref<8x128xf32, #tpu.memory_space<vmem>>) attributes {dimension_semantics = [#tpu.dimension_semantics<parallel>], iteration_bounds = array<i64: 1>, scalar_prefetch = 0 : i64, scratch_operands = 0 : i64, tpu.core_type = #tpu.core_type<tc>, window_params = [{transform_indices = @transform_0, window_bounds = array<i64: 8, 128>}, {pipeline_mode = #tpu.pipeline_mode<synchronous>, transform_indices = @transform_1, window_bounds = array<i64: 128, 256>}, {pipeline_mode = #tpu.pipeline_mode<synchronous>, transform_indices = @transform_2, window_bounds = array<i64: 1, 256>}, {pipeline_mode = #tpu.pipeline_mode<synchronous>, transform_indices = @transform_3, window_bounds = array<i64: 256, 128>}, {pipeline_mode = #tpu.pipeline_mode<synchronous>, transform_indices = @transform_4, window_bounds = array<i64: 1, 128>}, {pipeline_mode = #tpu.pipeline_mode<synchronous>, transform_indices = @transform_5, window_bounds = array<i64: 128, 128>}, {pipeline_mode = #tpu.pipeline_mode<synchronous>, transform_indices = @transform_6, window_bounds = array<i64: 1, 128>}, {transform_indices = @transform_7, window_bounds = array<i64: 8, 128>}]} {
    %c0 = arith.constant 0 : index
    %c0_0 = arith.constant 0 : index
    %0 = vector.load %arg1[%c0, %c0_0] : memref<8x128xbf16, #tpu.memory_space<vmem>>, vector<8x128xbf16>
    %c0_1 = arith.constant 0 : index
    %c0_2 = arith.constant 0 : index
    %1 = vector.load %arg2[%c0_1, %c0_2] : memref<128x256xbf16, #tpu.memory_space<vmem>>, vector<128x256xbf16>
    %cst = arith.constant dense<0.000000e+00> : vector<8x256xf32>
    %2 = tpu.matmul %0, %1, %cst {dimension_numbers = #tpu.dot_dimension_numbers<[1], [0], [0], [1], [0, 0, 1, 1], [], []>} : vector<8x128xbf16>, vector<128x256xbf16>, vector<8x256xf32> -> vector<8x256xf32>
    %c0_3 = arith.constant 0 : index
    %c0_4 = arith.constant 0 : index
    %3 = vector.load %arg3[%c0_3, %c0_4] : memref<1x256xf32, #tpu.memory_space<vmem>>, vector<1x256xf32>
    %4 = vector.broadcast %3 : vector<1x256xf32> to vector<8x256xf32>
    %5 = arith.addf %2, %4 : vector<8x256xf32>
    %cst_5 = arith.constant 0.000000e+00 : f32
    %6 = vector.broadcast %cst_5 : f32 to vector<8x256xf32>
    %7 = arith.maximumf %5, %6 : vector<8x256xf32>
    %8 = arith.truncf %7 : vector<8x256xf32> to vector<8x256xbf16>
    %c0_6 = arith.constant 0 : index
    %c0_7 = arith.constant 0 : index
    %9 = vector.load %arg4[%c0_6, %c0_7] : memref<256x128xbf16, #tpu.memory_space<vmem>>, vector<256x128xbf16>
    %cst_8 = arith.constant dense<0.000000e+00> : vector<8x128xf32>
    %10 = tpu.matmul %8, %9, %cst_8 {dimension_numbers = #tpu.dot_dimension_numbers<[1], [0], [0], [1], [0, 0, 1, 1], [], []>} : vector<8x256xbf16>, vector<256x128xbf16>, vector<8x128xf32> -> vector<8x128xf32>
    %c0_9 = arith.constant 0 : index
    %c0_10 = arith.constant 0 : index
    %11 = vector.load %arg5[%c0_9, %c0_10] : memref<1x128xf32, #tpu.memory_space<vmem>>, vector<1x128xf32>
    %12 = vector.broadcast %11 : vector<1x128xf32> to vector<8x128xf32>
    %13 = arith.addf %10, %12 : vector<8x128xf32>
    %cst_11 = arith.constant 0.000000e+00 : f32
    %14 = vector.broadcast %cst_11 : f32 to vector<8x128xf32>
    %15 = arith.maximumf %13, %14 : vector<8x128xf32>
    %16 = arith.truncf %15 : vector<8x128xf32> to vector<8x128xbf16>
    %c0_12 = arith.constant 0 : index
    %c0_13 = arith.constant 0 : index
    %17 = vector.load %arg6[%c0_12, %c0_13] : memref<128x128xbf16, #tpu.memory_space<vmem>>, vector<128x128xbf16>
    %cst_14 = arith.constant dense<0.000000e+00> : vector<8x128xf32>
    %18 = tpu.matmul %16, %17, %cst_14 {dimension_numbers = #tpu.dot_dimension_numbers<[1], [0], [0], [1], [0, 0, 1, 1], [], []>} : vector<8x128xbf16>, vector<128x128xbf16>, vector<8x128xf32> -> vector<8x128xf32>
    %c0_15 = arith.constant 0 : index
    %c0_16 = arith.constant 0 : index
    %19 = vector.load %arg7[%c0_15, %c0_16] : memref<1x128xf32, #tpu.memory_space<vmem>>, vector<1x128xf32>
    %20 = vector.broadcast %19 : vector<1x128xf32> to vector<8x128xf32>
    %21 = arith.addf %18, %20 : vector<8x128xf32>
    %c0_17 = arith.constant 0 : index
    %c0_18 = arith.constant 0 : index
    %22 = vector.load %arg8[%c0_17, %c0_18] : memref<8x128xf32, #tpu.memory_space<vmem>>, vector<8x128xf32>
    tpu.vector_store %arg8[%c0_17, %c0_18], %21 {strides = array<i32>} : memref<8x128xf32, #tpu.memory_space<vmem>>, vector<8x128xf32>,
    return
  }
  func.func @transform_0(%arg0: i32) -> (i32, i32) {
    %c0_i32 = arith.constant 0 : i32
    %c0_i32_0 = arith.constant 0 : i32
    return %arg0, %c0_i32 : i32, i32
  }
  func.func @transform_1(%arg0: i32) -> (i32, i32) {
    %c0_i32 = arith.constant 0 : i32
    %c0_i32_0 = arith.constant 0 : i32
    %c0_i32_1 = arith.constant 0 : i32
    return %c0_i32, %c0_i32_0 : i32, i32
  }
  func.func @transform_2(%arg0: i32) -> (i32, i32) {
    %c0_i32 = arith.constant 0 : i32
    %c0_i32_0 = arith.constant 0 : i32
    %c0_i32_1 = arith.constant 0 : i32
    return %c0_i32, %c0_i32_0 : i32, i32
  }
  func.func @transform_3(%arg0: i32) -> (i32, i32) {
    %c0_i32 = arith.constant 0 : i32
    %c0_i32_0 = arith.constant 0 : i32
    %c0_i32_1 = arith.constant 0 : i32
    return %c0_i32, %c0_i32_0 : i32, i32
  }
  func.func @transform_4(%arg0: i32) -> (i32, i32) {
    %c0_i32 = arith.constant 0 : i32
    %c0_i32_0 = arith.constant 0 : i32
    %c0_i32_1 = arith.constant 0 : i32
    return %c0_i32, %c0_i32_0 : i32, i32
  }
  func.func @transform_5(%arg0: i32) -> (i32, i32) {
    %c0_i32 = arith.constant 0 : i32
    %c0_i32_0 = arith.constant 0 : i32
    %c0_i32_1 = arith.constant 0 : i32
    return %c0_i32, %c0_i32_0 : i32, i32
  }
  func.func @transform_6(%arg0: i32) -> (i32, i32) {
    %c0_i32 = arith.constant 0 : i32
    %c0_i32_0 = arith.constant 0 : i32
    %c0_i32_1 = arith.constant 0 : i32
    return %c0_i32, %c0_i32_0 : i32, i32
  }
  func.func @transform_7(%arg0: i32) -> (i32, i32) {
    %c0_i32 = arith.constant 0 : i32
    %c0_i32_0 = arith.constant 0 : i32
    return %arg0, %c0_i32 : i32, i32
  }
}

</mosaic_0001>

<llo_original>
// kernel: qnetwork_forward.1
$region0: #{qnetwork_forward.1}
  #allocation0 [shape = 'u32[]', space=smem, size = 0x4, offset = 0x4, fixed_abs, tag = 'smem constant byte address 0x4 - core index']
  #allocation1 [shape = 'u32[144,128]{1,0:T(1,128)}', space=vmem, size = 0x12000, scoped, tag = 'internal scratch']
  %s0 = inlined_call_operand.vmem [shape: bf16[8,128], index: 0, kind: input, shape index: {}]
  %s1 = inlined_call_operand.hbm [shape: bf16[128,256], index: 1, kind: input, shape index: {}]
  %s2 = inlined_call_operand.vmem [shape: f32[1,256], index: 2, kind: input, shape index: {}]
  %s3 = inlined_call_operand.hbm [shape: bf16[256,128], index: 3, kind: input, shape index: {}]
  %s4 = inlined_call_operand.vmem [shape: f32[1,128], index: 4, kind: input, shape index: {}]
  %s5 = inlined_call_operand.hbm [shape: bf16[128,128], index: 5, kind: input, shape index: {}]
  %s6 = inlined_call_operand.vmem [shape: f32[1,128], index: 6, kind: input, shape index: {}]
  %s7 = inlined_call_operand.vmem [shape: f32[8,128], index: 7, kind: output, shape index: {}]
  %s8 = sld [smem:[#allocation0]]
  $region50: #{qnetwork_forward.1} parent=0
    _
  %s10 = ssub.s32 1, %s8
  %s11 = scalar_select 0, %s10, %s8
  $region1: #{qnetwork_forward.1} parent=0
    #allocation2 [shape = 'u8[65536]{0}', space=vmem, size = 0x10000, scoped, tag = 'input window, operand 1, single buffered']
    #allocation3 [shape = 's32[1]{0}', space=sflag, size = 0x4, scoped, tag = 'scoped memory for qnetwork_forward.1']
    #allocation4 [shape = 'u8[65536]{0}', space=vmem, size = 0x10000, scoped, tag = 'input window, operand 3, single buffered']
    #allocation5 [shape = 's32[1]{0}', space=sflag, size = 0x4, scoped, tag = 'scoped memory for qnetwork_forward.1']
    #allocation6 [shape = 'u8[32768]{0}', space=vmem, size = 0x8000, scoped, tag = 'input window, operand 5, single buffered']
    %12 = vsyncpa [#allocation3], 0
    %13 = vsyncpa [#allocation5], 0
    // Predicated region
    $region2: #{qnetwork_forward.1} parent=1 // pred_check
      _
    $region3: #{qnetwork_forward.1} parent=1 // pred_check_branch
      %15 = sbr.rel (0) target = $region5
    $region4: #{qnetwork_forward.1} parent=1 // pred_region
      _
    $region5: #{qnetwork_forward.1} parent=1 // pred_fallthru
      _
    // Predicated region
    $region6: #{qnetwork_forward.1} parent=1 // pred_check
      _
    $region7: #{qnetwork_forward.1} parent=1 // pred_check_branch
      %17 = sbr.rel (0) target = $region9
    $region8: #{qnetwork_forward.1} parent=1 // pred_region
      %s19 = ssub.s32 2048, 2048
      %20 = vsyncadd [#allocation3], %s19
      %s21 = sshll.u32 [#allocation2], 4
      %s22 = int_to_ptr.vmem [resolvable:$true] %s21
      %27 = dma.hbm_to_vmem [thread:$0]  %s1, 2048, %s22, [#allocation3], 128, 128, 8
    $region9: #{qnetwork_forward.1} parent=1 // pred_fallthru
      _
    // Predicated region
    $region10: #{qnetwork_forward.1} parent=1 // pred_check
      _
    $region11: #{qnetwork_forward.1} parent=1 // pred_check_branch
      %29 = sbr.rel (0) target = $region13
    $region12: #{qnetwork_forward.1} parent=1 // pred_region
      _
    $region13: #{qnetwork_forward.1} parent=1 // pred_fallthru
      _
    // Predicated region
    $region14: #{qnetwork_forward.1} parent=1 // pred_check
      _
    $region15: #{qnetwork_forward.1} parent=1 // pred_check_branch
      %31 = sbr.rel (0) target = $region17
    $region16: #{qnetwork_forward.1} parent=1 // pred_region
      %s33 = ssub.s32 2048, 2048
      %34 = vsyncadd [#allocation5], %s33
      %s35 = sshll.u32 [#allocation4], 4
      %s36 = int_to_ptr.vmem [resolvable:$true] %s35
      %41 = dma.hbm_to_vmem [thread:$0]  %s3, 2048, %s36, [#allocation5], 64, 64, 4
    $region17: #{qnetwork_forward.1} parent=1 // pred_fallthru
      _
    // Predicated region
    $region18: #{qnetwork_forward.1} parent=1 // pred_check
      _
    $region19: #{qnetwork_forward.1} parent=1 // pred_check_branch
      %43 = sbr.rel (0) target = $region21
    $region20: #{qnetwork_forward.1} parent=1 // pred_region
      _
    $region21: #{qnetwork_forward.1} parent=1 // pred_fallthru
      _
    // Predicated region
    $region22: #{qnetwork_forward.1} parent=1 // pred_check
      _
    $region23: #{qnetwork_forward.1} parent=1 // pred_check_branch
      %45 = sbr.rel (0) target = $region25
    $region24: #{qnetwork_forward.1} parent=1 // pred_region
      %s47 = ssub.s32 1024, 1024
      %48 = vsyncadd [#allocation5], %s47
      %s49 = sshll.u32 [#allocation6], 4
      %s50 = int_to_ptr.vmem [resolvable:$true] %s49
      %55 = dma.hbm_to_vmem [thread:$0]  %s5, 1024, %s50, [#allocation5], 64, 64, 4
    $region25: #{qnetwork_forward.1} parent=1 // pred_fallthru
      _
    // Predicated region
    $region26: #{qnetwork_forward.1} parent=1 // pred_check
      _
    $region27: #{qnetwork_forward.1} parent=1 // pred_check_branch
      %57 = sbr.rel (0) target = $region29
    $region28: #{qnetwork_forward.1} parent=1 // pred_region
      _
    $region29: #{qnetwork_forward.1} parent=1 // pred_fallthru
      _
    // Predicated region
    $region30: #{qnetwork_forward.1} parent=1 // pred_check
      _
    $region31: #{qnetwork_forward.1} parent=1 // pred_check_branch
      %59 = sbr.rel (0) target = $region33
    $region32: #{qnetwork_forward.1} parent=1 // pred_region
      %60 = dma.done [#allocation3], 2048
    $region33: #{qnetwork_forward.1} parent=1 // pred_fallthru
      _
    // Predicated region
    $region34: #{qnetwork_forward.1} parent=1 // pred_check
      _
    $region35: #{qnetwork_forward.1} parent=1 // pred_check_branch
      %62 = sbr.rel (0) target = $region37
    $region36: #{qnetwork_forward.1} parent=1 // pred_region
      %63 = dma.done [#allocation5], 2048
    $region37: #{qnetwork_forward.1} parent=1 // pred_fallthru
      _
    // Predicated region
    $region38: #{qnetwork_forward.1} parent=1 // pred_check
      _
    $region39: #{qnetwork_forward.1} parent=1 // pred_check_branch
      %65 = sbr.rel (0) target = $region41
    $region40: #{qnetwork_forward.1} parent=1 // pred_region
      %66 = dma.done [#allocation5], 1024
    $region41: #{qnetwork_forward.1} parent=1 // pred_fallthru
      _
    %v68 = vld [vmem:[%s0] sm:$0xf]
    %v69 = vld [vmem:[#allocation2] sm:$0xff]
    %v70 = vld [vmem:[#allocation2 + $0x8] sm:$0xff]
    %v71 = vld [vmem:[#allocation2 + $0x10] sm:$0xff]
    %v72 = vld [vmem:[#allocation2 + $0x18] sm:$0xff]
    %v73 = vld [vmem:[#allocation2 + $0x20] sm:$0xff]
    %v74 = vld [vmem:[#allocation2 + $0x28] sm:$0xff]
    %v75 = vld [vmem:[#allocation2 + $0x30] sm:$0xff]
    %v76 = vld [vmem:[#allocation2 + $0x38] sm:$0xff]
    %v77 = vld [vmem:[#allocation2 + $0x40] sm:$0xff]
    %v78 = vld [vmem:[#allocation2 + $0x48] sm:$0xff]
    %v79 = vld [vmem:[#allocation2 + $0x50] sm:$0xff]
    %v80 = vld [vmem:[#allocation2 + $0x58] sm:$0xff]
    %v81 = vld [vmem:[#allocation2 + $0x60] sm:$0xff]
    %v82 = vld [vmem:[#allocation2 + $0x68] sm:$0xff]
    %v83 = vld [vmem:[#allocation2 + $0x70] sm:$0xff]
    %v84 = vld [vmem:[#allocation2 + $0x78] sm:$0xff]
    %v85 = vld [vmem:[%s2] sm:$0x3]
    %v87 = vlaneseq
    %v88 = vshrl.u32 %v87, 7
    %v89 = vsub.s32 0, %v88
    %v90 = vrot.slane %v85, %v89
    %v91 = vlaneseq
    %v92 = vshrl.u32 %v91, 7
    %v93 = vsub.s32 1, %v92
    %v94 = vrot.slane %v85, %v93
    %v113 = vunpack.c.l.b16 %v69
    %v114 = vunpack.c.h.b16 %v69
    %v115 = vunpack.c.l.b16 %v70
    %v116 = vunpack.c.h.b16 %v70
    %v117 = vunpack.c.l.b16 %v71
    %v118 = vunpack.c.h.b16 %v71
    %v119 = vunpack.c.l.b16 %v72
    %v120 = vunpack.c.h.b16 %v72
    %v121 = vunpack.c.l.b16 %v73
    %v122 = vunpack.c.h.b16 %v73
    %v123 = vunpack.c.l.b16 %v74
    %v124 = vunpack.c.h.b16 %v74
    %v125 = vunpack.c.l.b16 %v75
    %v126 = vunpack.c.h.b16 %v75
    %v127 = vunpack.c.l.b16 %v76
    %v128 = vunpack.c.h.b16 %v76
    %v129 = vunpack.c.l.b16 %v77
    %v130 = vunpack.c.h.b16 %v77
    %v131 = vunpack.c.l.b16 %v78
    %v132 = vunpack.c.h.b16 %v78
    %v133 = vunpack.c.l.b16 %v79
    %v134 = vunpack.c.h.b16 %v79
    %v135 = vunpack.c.l.b16 %v80
    %v136 = vunpack.c.h.b16 %v80
    %v137 = vunpack.c.l.b16 %v81
    %v138 = vunpack.c.h.b16 %v81
    %v139 = vunpack.c.l.b16 %v82
    %v140 = vunpack.c.h.b16 %v82
    %v141 = vunpack.c.l.b16 %v83
    %v142 = vunpack.c.h.b16 %v83
    %v143 = vunpack.c.l.b16 %v84
    %v144 = vunpack.c.h.b16 %v84
    %v145 = vpack.c.b16 %v115, %v113
    %v146 = vpack.c.b16 %v116, %v114
    %v147 = vpack.c.b16 %v119, %v117
    %v148 = vpack.c.b16 %v120, %v118
    %v149 = vpack.c.b16 %v123, %v121
    %v150 = vpack.c.b16 %v124, %v122
    %v151 = vpack.c.b16 %v127, %v125
    %v152 = vpack.c.b16 %v128, %v126
    %v153 = vpack.c.b16 %v131, %v129
    %v154 = vpack.c.b16 %v132, %v130
    %v155 = vpack.c.b16 %v135, %v133
    %v156 = vpack.c.b16 %v136, %v134
    %v157 = vpack.c.b16 %v139, %v137
    %v158 = vpack.c.b16 %v140, %v138
    %v159 = vpack.c.b16 %v143, %v141
    %v160 = vpack.c.b16 %v144, %v142
    %177 = vmatprep.subr.bf16.mxu0 %v146
    %178 = vmatpush1.bf16.msra.mxu0 %v145
    %179 = vmatprep.subr.bf16.mxu0 %v148
    %180 = vmatpush1.bf16.msra.mxu0 %v147
    %181 = vmatprep.subr.bf16.mxu0 %v150
    %182 = vmatpush1.bf16.msra.mxu0 %v149
    %183 = vmatprep.subr.bf16.mxu0 %v152
    %184 = vmatpush1.bf16.msra.mxu0 %v151
    %185 = vmatprep.subr.bf16.mxu0 %v154
    %186 = vmatpush1.bf16.msra.mxu0 %v153
    %187 = vmatprep.subr.bf16.mxu0 %v156
    %188 = vmatpush1.bf16.msra.mxu0 %v155
    %189 = vmatprep.subr.bf16.mxu0 %v158
    %190 = vmatpush1.bf16.msra.mxu0 %v157
    %191 = vmatprep.subr.bf16.mxu0 %v160
    %192 = vmatpush1.bf16.msra.mxu0 %v159
    %193 = vmatprep.subr.bf16.mxu0 0
    %194 = vmatpush1.bf16.msra.mxu0 0
    %195 = vmatprep.subr.bf16.mxu0 0
    %196 = vmatpush1.bf16.msra.mxu0 0
    %197 = vmatprep.subr.bf16.mxu0 0
    %198 = vmatpush1.bf16.msra.mxu0 0
    %199 = vmatprep.subr.bf16.mxu0 0
    %200 = vmatpush1.bf16.msra.mxu0 0
    %201 = vmatprep.subr.bf16.mxu0 0
    %202 = vmatpush1.bf16.msra.mxu0 0
    %203 = vmatprep.subr.bf16.mxu0 0
    %204 = vmatpush1.bf16.msra.mxu0 0
    %205 = vmatprep.subr.bf16.mxu0 0
    %206 = vmatpush1.bf16.msra.mxu0 0
    %207 = vmatprep.subr.bf16.mxu0 0
    %208 = vmatpush1.bf16.msra.mxu0 0
    %209 = vmatprep.mubr.bf16.mxu0 0
    %210 = vmatmul.mubr.bf16.gmra.mrb[0].mxu0 %v68
    %v211 = vpop.f32.mrb[0].mxu0
    %v212 = vadd.f32 %v90, %v211
    %v213 = vpop.f32.mrb[0].mxu0
    %v214 = vadd.f32 %v94, %v213
    %v215 = vpop.f32.mrb[0].mxu0
    %v216 = vpop.f32.mrb[0].mxu0
    %217 = vdwg.mxu0
    %v218 = vmax.f32 %v212, 0.0
    %v219 = vmax.f32 %v214, 0.0
    %v220 = vpack.c.bf16 %v218, %v218
    %v221 = vpack.c.bf16 %v219, %v219
    %v222 = vld [vmem:[#allocation4] sm:$0xf]
    %v223 = vld [vmem:[#allocation4 + $0x4] sm:$0xf]
    %v224 = vld [vmem:[#allocation4 + $0x8] sm:$0xf]
    %v225 = vld [vmem:[#allocation4 + $0xc] sm:$0xf]
    %v226 = vld [vmem:[#allocation4 + $0x10] sm:$0xf]
    %v227 = vld [vmem:[#allocation4 + $0x14] sm:$0xf]
    %v228 = vld [vmem:[#allocation4 + $0x18] sm:$0xf]
    %v229 = vld [vmem:[#allocation4 + $0x1c] sm:$0xf]
    %v230 = vld [vmem:[#allocation4 + $0x20] sm:$0xf]
    %v231 = vld [vmem:[#allocation4 + $0x24] sm:$0xf]
    %v232 = vld [vmem:[#allocation4 + $0x28] sm:$0xf]
    %v233 = vld [vmem:[#allocation4 + $0x2c] sm:$0xf]
    %v234 = vld [vmem:[#allocation4 + $0x30] sm:$0xf]
    %v235 = vld [vmem:[#allocation4 + $0x34] sm:$0xf]
    %v236 = vld [vmem:[#allocation4 + $0x38] sm:$0xf]
    %v237 = vld [vmem:[#allocation4 + $0x3c] sm:$0xf]
    %v238 = vld [vmem:[#allocation4 + $0x40] sm:$0xf]
    %v239 = vld [vmem:[#allocation4 + $0x44] sm:$0xf]
    %v240 = vld [vmem:[#allocation4 + $0x48] sm:$0xf]
    %v241 = vld [vmem:[#allocation4 + $0x4c] sm:$0xf]
    %v242 = vld [vmem:[#allocation4 + $0x50] sm:$0xf]
    %v243 = vld [vmem:[#allocation4 + $0x54] sm:$0xf]
    %v244 = vld [vmem:[#allocation4 + $0x58] sm:$0xf]
    %v245 = vld [vmem:[#allocation4 + $0x5c] sm:$0xf]
    %v246 = vld [vmem:[#allocation4 + $0x60] sm:$0xf]
    %v247 = vld [vmem:[#allocation4 + $0x64] sm:$0xf]
    %v248 = vld [vmem:[#allocation4 + $0x68] sm:$0xf]
    %v249 = vld [vmem:[#allocation4 + $0x6c] sm:$0xf]
    %v250 = vld [vmem:[#allocation4 + $0x70] sm:$0xf]
    %v251 = vld [vmem:[#allocation4 + $0x74] sm:$0xf]
    %v252 = vld [vmem:[#allocation4 + $0x78] sm:$0xf]
    %v253 = vld [vmem:[#allocation4 + $0x7c] sm:$0xf]
    %v254 = vld [vmem:[%s4] sm:$0x1]
    %v256 = vlaneseq
    %v257 = vshrl.u32 %v256, 7
    %v258 = vsub.s32 0, %v257
    %v259 = vrot.slane %v254, %v258
    %v293 = vunpack.c.l.b16 %v222
    %v294 = vunpack.c.l.b16 %v223
    %v295 = vunpack.c.l.b16 %v224
    %v296 = vunpack.c.l.b16 %v225
    %v297 = vunpack.c.l.b16 %v226
    %v298 = vunpack.c.l.b16 %v227
    %v299 = vunpack.c.l.b16 %v228
    %v300 = vunpack.c.l.b16 %v229
    %v301 = vunpack.c.l.b16 %v230
    %v302 = vunpack.c.l.b16 %v231
    %v303 = vunpack.c.l.b16 %v232
    %v304 = vunpack.c.l.b16 %v233
    %v305 = vunpack.c.l.b16 %v234
    %v306 = vunpack.c.l.b16 %v235
    %v307 = vunpack.c.l.b16 %v236
    %v308 = vunpack.c.l.b16 %v237
    %v309 = vunpack.c.l.b16 %v238
    %v310 = vunpack.c.l.b16 %v239
    %v311 = vunpack.c.l.b16 %v240
    %v312 = vunpack.c.l.b16 %v241
    %v313 = vunpack.c.l.b16 %v242
    %v314 = vunpack.c.l.b16 %v243
    %v315 = vunpack.c.l.b16 %v244
    %v316 = vunpack.c.l.b16 %v245
    %v317 = vunpack.c.l.b16 %v246
    %v318 = vunpack.c.l.b16 %v247
    %v319 = vunpack.c.l.b16 %v248
    %v320 = vunpack.c.l.b16 %v249
    %v321 = vunpack.c.l.b16 %v250
    %v322 = vunpack.c.l.b16 %v251
    %v323 = vunpack.c.l.b16 %v252
    %v324 = vunpack.c.l.b16 %v253
    %v325 = vpack.c.b16 %v294, %v293
    %v326 = vpack.c.b16 %v296, %v295
    %v327 = vpack.c.b16 %v298, %v297
    %v328 = vpack.c.b16 %v300, %v299
    %v329 = vpack.c.b16 %v302, %v301
    %v330 = vpack.c.b16 %v304, %v303
    %v331 = vpack.c.b16 %v306, %v305
    %v332 = vpack.c.b16 %v308, %v307
    %v333 = vpack.c.b16 %v310, %v309
    %v334 = vpack.c.b16 %v312, %v311
    %v335 = vpack.c.b16 %v314, %v313
    %v336 = vpack.c.b16 %v316, %v315
    %v337 = vpack.c.b16 %v318, %v317
    %v338 = vpack.c.b16 %v320, %v319
    %v339 = vpack.c.b16 %v322, %v321
    %v340 = vpack.c.b16 %v324, %v323
    %357 = vmatprep.subr.bf16.mxu0 0
    %358 = vmatpush1.bf16.msra.mxu0 %v325
    %359 = vmatprep.subr.bf16.mxu0 0
    %360 = vmatpush1.bf16.msra.mxu0 %v326
    %361 = vmatprep.subr.bf16.mxu0 0
    %362 = vmatpush1.bf16.msra.mxu0 %v327
    %363 = vmatprep.subr.bf16.mxu0 0
    %364 = vmatpush1.bf16.msra.mxu0 %v328
    %365 = vmatprep.subr.bf16.mxu0 0
    %366 = vmatpush1.bf16.msra.mxu0 %v329
    %367 = vmatprep.subr.bf16.mxu0 0
    %368 = vmatpush1.bf16.msra.mxu0 %v330
    %369 = vmatprep.subr.bf16.mxu0 0
    %370 = vmatpush1.bf16.msra.mxu0 %v331
    %371 = vmatprep.subr.bf16.mxu0 0
    %372 = vmatpush1.bf16.msra.mxu0 %v332
    %373 = vmatprep.subr.bf16.mxu0 0
    %374 = vmatpush1.bf16.msra.mxu0 %v333
    %375 = vmatprep.subr.bf16.mxu0 0
    %376 = vmatpush1.bf16.msra.mxu0 %v334
    %377 = vmatprep.subr.bf16.mxu0 0
    %378 = vmatpush1.bf16.msra.mxu0 %v335
    %379 = vmatprep.subr.bf16.mxu0 0
    %380 = vmatpush1.bf16.msra.mxu0 %v336
    %381 = vmatprep.subr.bf16.mxu0 0
    %382 = vmatpush1.bf16.msra.mxu0 %v337
    %383 = vmatprep.subr.bf16.mxu0 0
    %384 = vmatpush1.bf16.msra.mxu0 %v338
    %385 = vmatprep.subr.bf16.mxu0 0
    %386 = vmatpush1.bf16.msra.mxu0 %v339
    %387 = vmatprep.subr.bf16.mxu0 0
    %388 = vmatpush1.bf16.msra.mxu0 %v340
    %389 = vmatprep.mubr.bf16.mxu0 %v221
    %390 = vmatmul.mubr.bf16.gmra.mrb[0].mxu0 %v220
    %v391 = vpop.f32.mrb[0].mxu0
    %v392 = vadd.f32 %v259, %v391
    %v393 = vpop.f32.mrb[0].mxu0
    %v394 = vpop.f32.mrb[0].mxu0
    %v395 = vpop.f32.mrb[0].mxu0
    %396 = vdwg.mxu0
    %v397 = vmax.f32 %v392, 0.0
    %v398 = vpack.c.bf16 %v397, %v397
    %v399 = vld [vmem:[#allocation6] sm:$0xf]
    %v400 = vld [vmem:[#allocation6 + $0x4] sm:$0xf]
    %v401 = vld [vmem:[#allocation6 + $0x8] sm:$0xf]
    %v402 = vld [vmem:[#allocation6 + $0xc] sm:$0xf]
    %v403 = vld [vmem:[#allocation6 + $0x10] sm:$0xf]
    %v404 = vld [vmem:[#allocation6 + $0x14] sm:$0xf]
    %v405 = vld [vmem:[#allocation6 + $0x18] sm:$0xf]
    %v406 = vld [vmem:[#allocation6 + $0x1c] sm:$0xf]
    %v407 = vld [vmem:[#allocation6 + $0x20] sm:$0xf]
    %v408 = vld [vmem:[#allocation6 + $0x24] sm:$0xf]
    %v409 = vld [vmem:[#allocation6 + $0x28] sm:$0xf]
    %v410 = vld [vmem:[#allocation6 + $0x2c] sm:$0xf]
    %v411 = vld [vmem:[#allocation6 + $0x30] sm:$0xf]
    %v412 = vld [vmem:[#allocation6 + $0x34] sm:$0xf]
    %v413 = vld [vmem:[#allocation6 + $0x38] sm:$0xf]
    %v414 = vld [vmem:[#allocation6 + $0x3c] sm:$0xf]
    %v415 = vld [vmem:[%s6] sm:$0x1]
    %v417 = vlaneseq
    %v418 = vshrl.u32 %v417, 7
    %v419 = vsub.s32 0, %v418
    %v420 = vrot.slane %v415, %v419
    %v438 = vunpack.c.l.b16 %v399
    %v439 = vunpack.c.l.b16 %v400
    %v440 = vunpack.c.l.b16 %v401
    %v441 = vunpack.c.l.b16 %v402
    %v442 = vunpack.c.l.b16 %v403
    %v443 = vunpack.c.l.b16 %v404
    %v444 = vunpack.c.l.b16 %v405
    %v445 = vunpack.c.l.b16 %v406
    %v446 = vunpack.c.l.b16 %v407
    %v447 = vunpack.c.l.b16 %v408
    %v448 = vunpack.c.l.b16 %v409
    %v449 = vunpack.c.l.b16 %v410
    %v450 = vunpack.c.l.b16 %v411
    %v451 = vunpack.c.l.b16 %v412
    %v452 = vunpack.c.l.b16 %v413
    %v453 = vunpack.c.l.b16 %v414
    %v454 = vpack.c.b16 %v439, %v438
    %v455 = vpack.c.b16 %v441, %v440
    %v456 = vpack.c.b16 %v443, %v442
    %v457 = vpack.c.b16 %v445, %v444
    %v458 = vpack.c.b16 %v447, %v446
    %v459 = vpack.c.b16 %v449, %v448
    %v460 = vpack.c.b16 %v451, %v450
    %v461 = vpack.c.b16 %v453, %v452
    %470 = vmatprep.subr.bf16.mxu0 0
    %471 = vmatpush1.bf16.msra.mxu0 %v454
    %472 = vmatprep.subr.bf16.mxu0 0
    %473 = vmatpush1.bf16.msra.mxu0 %v455
    %474 = vmatprep.subr.bf16.mxu0 0
    %475 = vmatpush1.bf16.msra.mxu0 %v456
    %476 = vmatprep.subr.bf16.mxu0 0
    %477 = vmatpush1.bf16.msra.mxu0 %v457
    %478 = vmatprep.subr.bf16.mxu0 0
    %479 = vmatpush1.bf16.msra.mxu0 %v458
    %480 = vmatprep.subr.bf16.mxu0 0
    %481 = vmatpush1.bf16.msra.mxu0 %v459
    %482 = vmatprep.subr.bf16.mxu0 0
    %483 = vmatpush1.bf16.msra.mxu0 %v460
    %484 = vmatprep.subr.bf16.mxu0 0
    %485 = vmatpush1.bf16.msra.mxu0 %v461
    %486 = vmatprep.subr.bf16.mxu0 0
    %487 = vmatpush1.bf16.msra.mxu0 0
    %488 = vmatprep.subr.bf16.mxu0 0
    %489 = vmatpush1.bf16.msra.mxu0 0
    %490 = vmatprep.subr.bf16.mxu0 0
    %491 = vmatpush1.bf16.msra.mxu0 0
    %492 = vmatprep.subr.bf16.mxu0 0
    %493 = vmatpush1.bf16.msra.mxu0 0
    %494 = vmatprep.subr.bf16.mxu0 0
    %495 = vmatpush1.bf16.msra.mxu0 0
    %496 = vmatprep.subr.bf16.mxu0 0
    %497 = vmatpush1.bf16.msra.mxu0 0
    %498 = vmatprep.subr.bf16.mxu0 0
    %499 = vmatpush1.bf16.msra.mxu0 0
    %500 = vmatprep.subr.bf16.mxu0 0
    %501 = vmatpush1.bf16.msra.mxu0 0
    %502 = vmatprep.mubr.bf16.mxu0 0
    %503 = vmatmul.mubr.bf16.gmra.mrb[0].mxu0 %v398
    %v504 = vpop.f32.mrb[0].mxu0
    %v505 = vadd.f32 %v420, %v504
    %v506 = vpop.f32.mrb[0].mxu0
    %v507 = vpop.f32.mrb[0].mxu0
    %v508 = vpop.f32.mrb[0].mxu0
    %509 = vdwg.mxu0
    %510 = vst [vmem:[%s7] sm:$0xff] %v505
    // Predicated region
    $region42: #{qnetwork_forward.1} parent=1 // pred_check
      _
    $region43: #{qnetwork_forward.1} parent=1 // pred_check_branch
      %512 = sbr.rel (0) target = $region45
    $region44: #{qnetwork_forward.1} parent=1 // pred_region
      _
    $region45: #{qnetwork_forward.1} parent=1 // pred_fallthru
      _
    // Predicated region
    $region46: #{qnetwork_forward.1} parent=1 // pred_check
      _
    $region47: #{qnetwork_forward.1} parent=1 // pred_check_branch
      %514 = sbr.rel (0) target = $region49
    $region48: #{qnetwork_forward.1} parent=1 // pred_region
      _
    $region49: #{qnetwork_forward.1} parent=1 // pred_fallthru
      _
    %515 = vsyncpa [#allocation3], 1
    %516 = vsyncpa [#allocation5], 1

</llo_original>
